<compile_context>
chip_gen: v7x
topology: tpu7x:2x2x1
jax: 0.10.0
libtpu: 0.0.40
codegen_flags: <defaults>
</compile_context>

<pallas_src>
import functools

import jax
import jax.numpy as jnp
from jax.experimental import pallas as pl
from jax.experimental.pallas import tpu as pltpu

_LANE = 128


def _pool_single_kernel(x_ref, max_ref, avg_ref, *, inv_hw):
    """hw fits in a single block (nk == 1): direct reduce, no scratch/mask."""
    x = x_ref[...]
    # Max is exact in the input dtype (bf16-safe); sum accumulates in f32.
    max_ref[...] = jnp.max(x, axis=-1, keepdims=True).astype(max_ref.dtype)
    s = jnp.sum(x.astype(jnp.float32), axis=-1, keepdims=True)
    avg_ref[...] = (s * inv_hw).astype(avg_ref.dtype)


def _pool_multi_kernel(x_ref, max_ref, avg_ref, acc_max, acc_sum, *,
                       hw, tk, nk, inv_hw):
    """hw spans nk > 1 blocks of width tk (tk % 128 == 0).

    acc_max: (tm, 128) in the input dtype, acc_sum: (tm, 128) f32. Lane-dense
    accumulation; the cross-lane reduce only happens in the finalize step.
    """
    k = pl.program_id(1)
    n_chunks = tk // _LANE

    @pl.when(k == 0)
    def _init():
        acc_max[...] = jnp.full_like(acc_max, -jnp.inf)
        acc_sum[...] = jnp.zeros_like(acc_sum)

    def accum(num_chunks, mask_valid):
        # num_chunks / mask_valid are static Python ints.
        m = acc_max[...]
        s = acc_sum[...]
        for g in range(num_chunks):
            c = x_ref[:, pl.ds(g * _LANE, _LANE)]
            if mask_valid and g == num_chunks - 1:
                # Only the single chunk straddling the hw boundary is masked.
                lane = jax.lax.broadcasted_iota(jnp.int32, (1, _LANE), 1)
                valid = lane < mask_valid
                c_max = jnp.where(valid, c, jnp.array(-jnp.inf, dtype=c.dtype))
                c_sum = jnp.where(valid, c.astype(jnp.float32), 0.0)
            else:
                c_max = c
                c_sum = c.astype(jnp.float32)
            m = jnp.maximum(m, c_max)
            s = s + c_sum
        acc_max[...] = m
        acc_sum[...] = s

    rem = hw - (nk - 1) * tk          # valid columns in the final hw block
    if rem == tk:
        # hw divides tk: every block is fully valid, never emit mask code.
        accum(n_chunks, 0)
    else:
        @pl.when(k < nk - 1)
        def _full_blocks():
            accum(n_chunks, 0)

        @pl.when(k == nk - 1)
        def _last_block():
            last_chunks = -(-rem // _LANE)       # ceil; skip all-invalid chunks
            accum(last_chunks, rem % _LANE)      # 0 => last chunk fully valid

    @pl.when(k == nk - 1)
    def _finalize():
        # Single cross-lane (XLU) reduce per row tile.
        max_ref[...] = jnp.max(acc_max[...], axis=-1,
                               keepdims=True).astype(max_ref.dtype)
        s = jnp.sum(acc_sum[...], axis=-1, keepdims=True)
        avg_ref[...] = (s * inv_hw).astype(avg_ref.dtype)


def adaptive_concat_pool2d(x, *, row_tile=512, col_tile=2048,
                           vmem_limit_bytes=32 * 1024 * 1024):
    """x: (N, C, H, W) float -> (N, 2*C, 1, 1) = [global max, global avg]."""
    N, C, H, W = x.shape
    nc, hw = N * C, H * W
    x2d = x.reshape(nc, hw)

    itemsize = jnp.dtype(x.dtype).itemsize
    sub = {4: 8, 2: 16, 1: 32}.get(itemsize, 8)          # dtype-aware sublanes
    # Keep DMA chunk bytes roughly constant for narrow dtypes (halves nk for bf16).
    col_tile = col_tile * (4 // max(itemsize, 1))
    col_tile = max(_LANE, (col_tile // _LANE) * _LANE)
    row_tile = max(sub, (row_tile // sub) * sub)

    # Row-tile selection. When the whole NC axis fits one tile, split it into
    # two row blocks so both v7x TensorCores get work under "parallel".
    if nc > row_tile:
        tm = row_tile
    elif nc >= 2 * sub:
        half = -(-nc // 2)
        tm = -(-half // sub) * sub
        if tm >= nc:
            tm = nc
    else:
        tm = nc
    grid_rows = pl.cdiv(nc, tm)

    out_shape = (jax.ShapeDtypeStruct((nc, 1), x.dtype),
                 jax.ShapeDtypeStruct((nc, 1), x.dtype))
    inv_hw = 1.0 / hw

    if hw <= col_tile:
        # Whole hw in one block: simple 1-D grid over row tiles.
        kernel = functools.partial(_pool_single_kernel, inv_hw=inv_hw)
        max_out, avg_out = pl.pallas_call(
            kernel,
            out_shape=out_shape,
            grid_spec=pltpu.PrefetchScalarGridSpec(
                num_scalar_prefetch=0,
                grid=(grid_rows,),
                in_specs=[pl.BlockSpec((tm, hw), lambda i: (i, 0))],
                out_specs=(pl.BlockSpec((tm, 1), lambda i: (i, 0)),
                           pl.BlockSpec((tm, 1), lambda i: (i, 0))),
            ),
            compiler_params=pltpu.CompilerParams(
                dimension_semantics=("parallel",),
                vmem_limit_bytes=vmem_limit_bytes),
        )(x2d)
    else:
        tk = col_tile                      # multiple of 128 by construction
        nk = pl.cdiv(hw, tk)
        kernel = functools.partial(_pool_multi_kernel, hw=hw, tk=tk, nk=nk,
                                   inv_hw=inv_hw)
        max_out, avg_out = pl.pallas_call(
            kernel,
            out_shape=out_shape,
            grid_spec=pltpu.PrefetchScalarGridSpec(
                num_scalar_prefetch=0,
                grid=(grid_rows, nk),
                in_specs=[pl.BlockSpec((tm, tk), lambda i, k: (i, k))],
                out_specs=(pl.BlockSpec((tm, 1), lambda i, k: (i, 0)),
                           pl.BlockSpec((tm, 1), lambda i, k: (i, 0))),
                scratch_shapes=[
                    pltpu.VMEM((tm, _LANE), x.dtype),      # running max (lane-dense)
                    pltpu.VMEM((tm, _LANE), jnp.float32),  # running sum (lane-dense)
                ],
            ),
            compiler_params=pltpu.CompilerParams(
                dimension_semantics=("parallel", "arbitrary"),
                vmem_limit_bytes=vmem_limit_bytes),
        )(x2d)

    max_out = max_out.reshape(N, C, 1, 1)
    avg_out = avg_out.reshape(N, C, 1, 1)
    # torch.cat([mp(x), ap(x)], dim=1): max first, then avg.
    return jnp.concatenate([max_out, avg_out], axis=1)


def _reference(x):
    return jnp.concatenate(
        [jnp.max(x, axis=(2, 3), keepdims=True),
         jnp.mean(x, axis=(2, 3), keepdims=True)],
        axis=1,
    )


if __name__ == "__main__":
    key = jax.random.PRNGKey(0)

    # Test 1: basic shape -> single-block (hw <= col_tile) fast path.
    N, C, H, W = 2, 4, 16, 16
    x = jax.random.normal(key, (N, C, H, W), dtype=jnp.float32)
    out = jax.block_until_ready(adaptive_concat_pool2d(x))
    assert out.shape == (N, 2 * C, 1, 1)
    assert jnp.allclose(out, _reference(x), atol=1e-5, rtol=1e-5)

    # Test 2: multi-block hw with a masked final chunk + partial row block.
    N2, C2, H2, W2 = 2, 5, 12, 12   # nc=10 (row_tile=8 -> partial), hw=144 > 128
    x2 = jax.random.normal(jax.random.PRNGKey(1), (N2, C2, H2, W2),
                           dtype=jnp.float32)
    out2 = jax.block_until_ready(
        adaptive_concat_pool2d(x2, row_tile=8, col_tile=128))
    assert out2.shape == (N2, 2 * C2, 1, 1)
    assert jnp.allclose(out2, _reference(x2), atol=1e-5, rtol=1e-5)

    # Test 3: bf16 input, multi-block hw, no masking (hw % tk == 0).
    N3, C3, H3, W3 = 2, 4, 8, 32    # nc=8, hw=256; col_tile=64 -> tk=128, nk=2
    x3 = jax.random.normal(jax.random.PRNGKey(2), (N3, C3, H3, W3),
                           dtype=jnp.bfloat16)
    out3 = jax.block_until_ready(adaptive_concat_pool2d(x3, col_tile=64))
    ref3 = _reference(x3.astype(jnp.float32)).astype(jnp.bfloat16)
    assert out3.shape == (N3, 2 * C3, 1, 1)
    assert jnp.allclose(out3.astype(jnp.float32), ref3.astype(jnp.float32),
                        atol=2e-2, rtol=2e-2)

    # Test 4: NC fits one row tile -> split into 2 row blocks (v7x megacore).
    N4, C4, H4, W4 = 2, 16, 16, 16  # nc=32 -> tm=16, grid_rows=2
    x4 = jax.random.normal(jax.random.PRNGKey(3), (N4, C4, H4, W4),
                           dtype=jnp.float32)
    out4 = jax.block_until_ready(adaptive_concat_pool2d(x4))
    assert out4.shape == (N4, 2 * C4, 1, 1)
    assert jnp.allclose(out4, _reference(x4), atol=1e-5, rtol=1e-5)

    print("KERNEL_OK")
</pallas_src>

<mosaic_0001>
module attributes {stable_mosaic.version = 11 : i64} {
  func.func @_pool_single_kernel(%arg0: i32, %arg1: memref<8x256xf32, #tpu.memory_space<vmem>>, %arg2: memref<8x1xf32, #tpu.memory_space<vmem>>, %arg3: memref<8x1xf32, #tpu.memory_space<vmem>>) attributes {dimension_semantics = [#tpu.dimension_semantics<parallel>], iteration_bounds = array<i64: 1>, scalar_prefetch = 0 : i64, scratch_operands = 0 : i64, tpu.core_type = #tpu.core_type<tc>, window_params = [{transform_indices = @transform_0, window_bounds = array<i64: 8, 256>}, {transform_indices = @transform_1, window_bounds = array<i64: 8, 1>}, {transform_indices = @transform_2, window_bounds = array<i64: 8, 1>}]} {
    %c0 = arith.constant 0 : index
    %c0_0 = arith.constant 0 : index
    %0 = vector.load %arg1[%c0, %c0_0] : memref<8x256xf32, #tpu.memory_space<vmem>>, vector<8x256xf32>
    %cst = arith.constant dense<0xFF800000> : vector<8xf32>
    %1 = vector.multi_reduction <maximumf>, %0, %cst [1] : vector<8x256xf32> to vector<8xf32>
    %2 = vector.shape_cast %1 : vector<8xf32> to vector<8x1xf32>
    %c0_1 = arith.constant 0 : index
    %c0_2 = arith.constant 0 : index
    %3 = vector.load %arg2[%c0_1, %c0_2] : memref<8x1xf32, #tpu.memory_space<vmem>>, vector<8x1xf32>
    tpu.vector_store %arg2[%c0_1, %c0_2], %2 {strides = array<i32>} : memref<8x1xf32, #tpu.memory_space<vmem>>, vector<8x1xf32>,
    %cst_3 = arith.constant dense<0.000000e+00> : vector<8xf32>
    %4 = vector.multi_reduction <add>, %0, %cst_3 [1] : vector<8x256xf32> to vector<8xf32>
    %5 = vector.shape_cast %4 : vector<8xf32> to vector<8x1xf32>
    %cst_4 = arith.constant 3.906250e-03 : f32
    %6 = vector.broadcast %cst_4 : f32 to vector<8x1xf32>
    %7 = arith.mulf %5, %6 : vector<8x1xf32>
    %c0_5 = arith.constant 0 : index
    %c0_6 = arith.constant 0 : index
    %8 = vector.load %arg3[%c0_5, %c0_6] : memref<8x1xf32, #tpu.memory_space<vmem>>, vector<8x1xf32>
    tpu.vector_store %arg3[%c0_5, %c0_6], %7 {strides = array<i32>} : memref<8x1xf32, #tpu.memory_space<vmem>>, vector<8x1xf32>,
    return
  }
  func.func @transform_0(%arg0: i32) -> (i32, i32) {
    %c0_i32 = arith.constant 0 : i32
    %c0_i32_0 = arith.constant 0 : i32
    return %arg0, %c0_i32 : i32, i32
  }
  func.func @transform_1(%arg0: i32) -> (i32, i32) {
    %c0_i32 = arith.constant 0 : i32
    %c0_i32_0 = arith.constant 0 : i32
    return %arg0, %c0_i32 : i32, i32
  }
  func.func @transform_2(%arg0: i32) -> (i32, i32) {
    %c0_i32 = arith.constant 0 : i32
    %c0_i32_0 = arith.constant 0 : i32
    return %arg0, %c0_i32 : i32, i32
  }
}

</mosaic_0001>

<llo_original>
// kernel: tpu_custom_call.1
$region0: #{tpu_custom_call.1}
  #allocation0 [shape = 'u32[]', space=smem, size = 0x4, offset = 0x4, fixed_abs, tag = 'smem constant byte address 0x4 - core index']
  #allocation1 [shape = 'u32[144,128]{1,0:T(1,128)}', space=vmem, size = 0x12000, scoped, tag = 'internal scratch']
  %s0 = inlined_call_operand.hbm [shape: f32[8,256], index: 0, kind: input, shape index: {}]
  %s1 = inlined_call_operand.vmem [shape: f32[8,1], index: 1, kind: output, shape index: {0}]
  %s2 = inlined_call_operand.vmem [shape: f32[8,1], index: 2, kind: output, shape index: {1}]
  %3 = xla_tuple %s1, %s2
  %s4 = sld [smem:[#allocation0]]
  $region26: #{tpu_custom_call.1} parent=0
    _
  %s6 = ssub.s32 1, %s4
  %s7 = scalar_select 0, %s6, %s4
  $region1: #{tpu_custom_call.1} parent=0
    #allocation2 [shape = 'u8[8192]{0}', space=vmem, size = 0x2000, scoped, tag = 'input window, operand 0, single buffered']
    #allocation3 [shape = 's32[1]{0}', space=sflag, size = 0x4, scoped, tag = 'scoped memory for tpu_custom_call.1']
    %8 = vsyncpa [#allocation3], 0
    // Predicated region
    $region2: #{tpu_custom_call.1} parent=1 // pred_check
      _
    $region3: #{tpu_custom_call.1} parent=1 // pred_check_branch
      %10 = sbr.rel (0) target = $region5
    $region4: #{tpu_custom_call.1} parent=1 // pred_region
      %s12 = ssub.s32 256, 256
      %13 = vsyncadd [#allocation3], %s12
      %s15 = sshll.u32 [#allocation2], 4
      %s16 = int_to_ptr.vmem [resolvable:$true] %s15
      %18 = dma.hbm_to_vmem [thread:$0]  %s0, 256, %s16, [#allocation3]
    $region5: #{tpu_custom_call.1} parent=1 // pred_fallthru
      _
    // Predicated region
    $region6: #{tpu_custom_call.1} parent=1 // pred_check
      _
    $region7: #{tpu_custom_call.1} parent=1 // pred_check_branch
      %20 = sbr.rel (0) target = $region9
    $region8: #{tpu_custom_call.1} parent=1 // pred_region
      %21 = dma.done [#allocation3], 256
    $region9: #{tpu_custom_call.1} parent=1 // pred_fallthru
      _
    %v22 = vld [vmem:[#allocation2] sm:$0xff]
    %v23 = vld [vmem:[#allocation2 + $0x8] sm:$0xff]
    %v24 = vmax.f32 %v22, %v23
    %25 = vmax.xlane.f32.xlu0 %v24
    %v26 = vpop.xlane.xlu0 %25
    %vm27 = vcmask 7168
    %28 = vst.msk [vmem:[%s1] sm:$0xff] %vm27, %v26
    %v29 = vadd.f32 %v22, %v23
    %30 = vadd.xlane.f32.xlu0 %v29
    %v31 = vpop.xlane.xlu0 %30
    %v32 = vmul.f32 %v31, 0.00390625
    %33 = vst.msk [vmem:[%s2] sm:$0xff] %vm27, %v32
    // Predicated region
    $region10: #{tpu_custom_call.1} parent=1 // pred_check
      _
    $region11: #{tpu_custom_call.1} parent=1 // pred_check_branch
      %35 = sbr.rel (0) target = $region13
    $region12: #{tpu_custom_call.1} parent=1 // pred_region
      _
    $region13: #{tpu_custom_call.1} parent=1 // pred_fallthru
      _
    // Predicated region
    $region14: #{tpu_custom_call.1} parent=1 // pred_check
      _
    $region15: #{tpu_custom_call.1} parent=1 // pred_check_branch
      %37 = sbr.rel (0) target = $region17
    $region16: #{tpu_custom_call.1} parent=1 // pred_region
      _
    $region17: #{tpu_custom_call.1} parent=1 // pred_fallthru
      _
    // Predicated region
    $region18: #{tpu_custom_call.1} parent=1 // pred_check
      _
    $region19: #{tpu_custom_call.1} parent=1 // pred_check_branch
      %39 = sbr.rel (0) target = $region21
    $region20: #{tpu_custom_call.1} parent=1 // pred_region
      _
    $region21: #{tpu_custom_call.1} parent=1 // pred_fallthru
      _
    // Predicated region
    $region22: #{tpu_custom_call.1} parent=1 // pred_check
      _
    $region23: #{tpu_custom_call.1} parent=1 // pred_check_branch
      %41 = sbr.rel (0) target = $region25
    $region24: #{tpu_custom_call.1} parent=1 // pred_region
      _
    $region25: #{tpu_custom_call.1} parent=1 // pred_fallthru
      _
    %42 = vsyncpa [#allocation3], 1

</llo_original>
